<compile_context>
chip_gen: v6e
topology: v6e:2x2x1
jax: 0.10.0
libtpu: 0.0.40
codegen_flags: <defaults>
</compile_context>

<pallas_src>
import functools
import itertools

import numpy as np
import jax
import jax.numpy as jnp
from jax.experimental import pallas as pl
from jax.experimental.pallas import tpu as pltpu

_LANES = 128


# ----------------------------------------------------------------------------
# Pallas kernel: fused bbox_transform_inv + clip_boxes (elementwise hot path)
# ----------------------------------------------------------------------------
def _proposal_kernel(delta_ref, anchor_ref, out_ref, *, do_clip, num_dims,
                     scene):
    # delta_ref / anchor_ref / out_ref : (2, D, TS, 128)  (batch dim squeezed)
    # scene : tuple of python floats (compile-time constants)
    for d in range(num_dims):
        a_ctr = anchor_ref[0, d]          # (TS, 128) dense vreg slab
        a_size = anchor_ref[1, d]
        p_ctr = delta_ref[0, d] * a_size + a_ctr          # bbox_transform_inv
        p_size = jnp.exp(delta_ref[1, d]) * a_size        # EUP exp
        if do_clip:
            sd = float(scene[d])
            half = p_size * 0.5
            s = jnp.clip(p_ctr - half, 0.0, sd)
            e = jnp.clip(p_ctr + half, 0.0, sd)
            p_ctr = (s + e) * 0.5
            p_size = e - s
        out_ref[0, d] = p_ctr             # full dense (TS, 128) stores
        out_ref[1, d] = p_size


def _proposal_pallas(deltas_k, anchors_k, *, tile_sublanes, do_clip, scene,
                     vmem_limit_bytes):
    B, two, D, S, L = deltas_k.shape
    assert two == 2 and L == _LANES and S % tile_sublanes == 0
    TS = tile_sublanes
    num_t = S // TS
    kernel = functools.partial(_proposal_kernel, do_clip=do_clip, num_dims=D,
                               scene=tuple(float(v) for v in scene))
    return pl.pallas_call(
        kernel,
        out_shape=jax.ShapeDtypeStruct((B, 2, D, S, L), jnp.float32),
        grid=(num_t, B),     # N-tile outer -> anchor block reused over inner B
        in_specs=[
            pl.BlockSpec((None, 2, D, TS, L),                          # deltas
                         lambda t, b: (b, 0, 0, t, 0)),
            pl.BlockSpec((2, D, TS, L),                                # anchors
                         lambda t, b: (0, 0, t, 0)),
        ],
        out_specs=pl.BlockSpec((None, 2, D, TS, L),
                               lambda t, b: (b, 0, 0, t, 0)),
        compiler_params=pltpu.CompilerParams(
            dimension_semantics=("parallel", "parallel"),
            vmem_limit_bytes=vmem_limit_bytes),
    )(deltas_k, anchors_k)


# ----------------------------------------------------------------------------
# Module (init glue in numpy, forward hot path in Pallas)
# ----------------------------------------------------------------------------
def _calc_start_end(center, size):
    half = size * 0.5
    return center - half, center + half


def _get_pixelwise_anchors(conv_shape, conv_stride_prod, raw_anchors,
                           pixel_center=0.5):
    ranges = [(np.arange(s, dtype=np.float32) + pixel_center) * st
              for s, st in zip(conv_shape, conv_stride_prod)]
    shifts = np.array(list(itertools.product(*ranges)), dtype=np.float32)
    shifts = shifts[:, None, :]                      # (P, 1, D)
    raw = np.asarray(raw_anchors, dtype=np.float32)  # (A, D)
    P, _, D = shifts.shape
    A = raw.shape[0]
    ctr = np.broadcast_to(shifts, (P, A, D))
    sz = np.broadcast_to(raw[None], (P, A, D))
    return np.stack([ctr, sz], axis=-2)              # (P, A, 2, D)


class AnchorDescriptionMultiLevelPallas:
    def __init__(self, scene_shape, conv_shape_levels, raw_anchor_levels,
                 conv_stride_levels, allowed_border=0, clip_boxes=True,
                 tile_sublanes=512, pallas_min_anchors=100_000):
        # tile_sublanes: sublane rows per N-tile (multiple of 8). 512 rows x
        #   128 lanes x 2 comps x D dims x 4B ~= 1.5 MiB/block for D=3, i.e.
        #   ~9 MiB double-buffered across 3 operands -> safe on v7x (64 MiB
        #   VMEM); sweep per generation.
        # pallas_min_anchors: below this anchor count the pure-JAX (XLA fused)
        #   path is used since the op is dominated by fixed per-call overhead.
        assert tile_sublanes % 8 == 0
        self.clip_boxes = clip_boxes
        self.pallas_min_anchors = pallas_min_anchors
        self.scene_shape = np.asarray(scene_shape, dtype=np.float32)
        self.num_dims = len(self.scene_shape)

        anchors_levels = [
            _get_pixelwise_anchors(cs, st, ra)
            for cs, st, ra in zip(conv_shape_levels, conv_stride_levels,
                                  raw_anchor_levels)
        ]
        flat_levels = [a.reshape(-1, 2, self.num_dims) for a in anchors_levels]
        all_anchors = np.concatenate(flat_levels, axis=0)   # (Ntot, 2, D)

        lower = -float(allowed_border)
        upper = self.scene_shape + float(allowed_border)
        start, end = _calc_start_end(all_anchors[:, 0], all_anchors[:, 1])
        inside = np.all(start >= lower, axis=-1) & np.all(end <= upper, axis=-1)
        self.inside_indicator = inside
        self.inside_anchors = all_anchors[inside]            # (N, 2, D)
        self.num_anchor_levels = [len(a) for a in flat_levels]

        # ---- kernel layout: (2, D, S, 128) with S a multiple of 8 ----------
        N = self.inside_anchors.shape[0]
        D = self.num_dims
        assert N > 0
        self._n_inside = N
        s_raw = (N + _LANES - 1) // _LANES
        if s_raw <= tile_sublanes:
            S = ((s_raw + 7) // 8) * 8          # one tile, sublane-dense
            TS = S
        else:
            TS = tile_sublanes
            S = ((s_raw + TS - 1) // TS) * TS   # tiles divide S exactly
        self._s = S
        self._ts = TS
        self._n_pad = S * _LANES

        anch = np.zeros((2, D, self._n_pad), dtype=np.float32)
        anch[0, :, :N] = self.inside_anchors[:, 0].T
        anch[1, :, :N] = self.inside_anchors[:, 1].T
        self._anchors_k = jnp.asarray(anch.reshape(2, D, S, _LANES))

        block_bytes = 2 * D * TS * _LANES * 4
        self._vmem_limit = int(min(64 * 2**20,
                                   max(16 * 2**20, 10 * block_bytes)))

        self._forward_jit = jax.jit(self._forward_impl)

    # ---- Pallas path (wrapper ops fused under one jit) ----------------------
    def _forward_impl(self, rpn_bbox, anchors_k):
        B, N, _, D = rpn_bbox.shape
        S, TS, Np = self._s, self._ts, self._n_pad
        # single transpose + single pad, then zero-cost reshape
        deltas = jnp.transpose(rpn_bbox, (0, 2, 3, 1))            # (B, 2, D, N)
        deltas = jnp.pad(deltas, ((0, 0), (0, 0), (0, 0), (0, Np - N)))
        deltas = deltas.reshape(B, 2, D, S, _LANES)

        out_k = _proposal_pallas(deltas, anchors_k,
                                 tile_sublanes=TS,
                                 do_clip=self.clip_boxes,
                                 scene=self.scene_shape,
                                 vmem_limit_bytes=self._vmem_limit)

        out = out_k.reshape(B, 2, D, Np)[..., :N]
        out = jnp.transpose(out, (0, 3, 1, 2))                    # (B, N, 2, D)
        return out

    def forward(self, rpn_bbox):
        # rpn_bbox: (B, N, 2, D) float32 deltas (delta_center, delta_log_size)
        B, N, two, D = rpn_bbox.shape
        assert two == 2 and D == self.num_dims and N == self._n_inside
        if N < self.pallas_min_anchors:
            # Tiny anchor counts: per-step / pallas_call overhead dominates,
            # XLA fusion of the reference path wins.
            return self.forward_reference(rpn_bbox)
        return self._forward_jit(rpn_bbox, self._anchors_k)

    # Pure-JAX reference of the same forward semantics, for verification.
    def forward_reference(self, rpn_bbox):
        anchors = jnp.asarray(self.inside_anchors)               # (N, 2, D)
        a_ctr, a_size = anchors[:, 0], anchors[:, 1]
        d_ctr, d_size = rpn_bbox[:, :, 0, :], rpn_bbox[:, :, 1, :]
        p_ctr = d_ctr * a_size + a_ctr
        p_size = jnp.exp(d_size) * a_size
        if self.clip_boxes:
            start = p_ctr - p_size * 0.5
            end = p_ctr + p_size * 0.5
            scene = jnp.asarray(self.scene_shape)
            start = jnp.clip(start, 0.0, scene)
            end = jnp.clip(end, 0.0, scene)
            p_ctr = (start + end) * 0.5
            p_size = end - start
        return jnp.stack([p_ctr, p_size], axis=-2)


# ----------------------------------------------------------------------------
if __name__ == "__main__":
    # Small, deterministic configuration (3-D scene).
    scene_shape = [16.0, 16.0, 16.0]
    conv_shape_levels = np.array([[4, 4, 4], [2, 2, 2]], dtype=np.int64)
    conv_stride_levels = np.array([[4.0, 4.0, 4.0], [8.0, 8.0, 8.0]],
                                  dtype=np.float32)
    raw_anchor_levels = [
        np.array([[4.0, 4.0, 4.0], [8.0, 8.0, 8.0]], dtype=np.float32),
        np.array([[8.0, 8.0, 8.0], [16.0, 16.0, 16.0]], dtype=np.float32),
    ]

    # pallas_min_anchors=0 so the demo exercises the Pallas kernel even at the
    # tiny demo anchor count.
    module = AnchorDescriptionMultiLevelPallas(
        scene_shape, conv_shape_levels, raw_anchor_levels, conv_stride_levels,
        allowed_border=0, clip_boxes=True, pallas_min_anchors=0)

    B = 2
    N = module._n_inside
    D = module.num_dims
    key = jax.random.PRNGKey(0)
    rpn_bbox = 0.1 * jax.random.normal(key, (B, N, 2, D), dtype=jnp.float32)

    out = module.forward(rpn_bbox)
    out = jax.block_until_ready(out)

    ref = jax.block_until_ready(module.forward_reference(rpn_bbox))
    np.testing.assert_allclose(np.asarray(out), np.asarray(ref),
                               rtol=1e-5, atol=1e-5)
    assert out.shape == (B, N, 2, D)
    print("KERNEL_OK")
</pallas_src>

<mosaic_0001>
module attributes {stable_mosaic.version = 11 : i64} {
  func.func @_proposal_kernel(%arg0: i32, %arg1: i32, %arg2: memref<1x2x3x8x128xf32, #tpu.memory_space<vmem>>, %arg3: memref<2x3x8x128xf32, #tpu.memory_space<vmem>>, %arg4: memref<1x2x3x8x128xf32, #tpu.memory_space<vmem>>) attributes {dimension_semantics = [#tpu.dimension_semantics<parallel>, #tpu.dimension_semantics<parallel>], iteration_bounds = array<i64: 1, 2>, scalar_prefetch = 0 : i64, scratch_operands = 0 : i64, tpu.core_type = #tpu.core_type<tc>, window_params = [{transform_indices = @transform_0, window_bounds = array<i64: 1, 2, 3, 8, 128>}, {transform_indices = @transform_1, window_bounds = array<i64: 2, 3, 8, 128>}, {transform_indices = @transform_2, window_bounds = array<i64: 1, 2, 3, 8, 128>}]} {
    %c0 = arith.constant 0 : index
    %c0_0 = arith.constant 0 : index
    %c0_1 = arith.constant 0 : index
    %c0_2 = arith.constant 0 : index
    %0 = vector.load %arg3[%c0, %c0_0, %c0_1, %c0_2] : memref<2x3x8x128xf32, #tpu.memory_space<vmem>>, vector<1x1x8x128xf32>
    %1 = vector.shape_cast %0 : vector<1x1x8x128xf32> to vector<8x128xf32>
    %c1 = arith.constant 1 : index
    %c0_3 = arith.constant 0 : index
    %c0_4 = arith.constant 0 : index
    %c0_5 = arith.constant 0 : index
    %2 = vector.load %arg3[%c1, %c0_3, %c0_4, %c0_5] : memref<2x3x8x128xf32, #tpu.memory_space<vmem>>, vector<1x1x8x128xf32>
    %3 = vector.shape_cast %2 : vector<1x1x8x128xf32> to vector<8x128xf32>
    %c0_6 = arith.constant 0 : index
    %c0_7 = arith.constant 0 : index
    %c0_8 = arith.constant 0 : index
    %c0_9 = arith.constant 0 : index
    %c0_10 = arith.constant 0 : index
    %4 = vector.load %arg2[%c0_6, %c0_7, %c0_8, %c0_9, %c0_10] : memref<1x2x3x8x128xf32, #tpu.memory_space<vmem>>, vector<1x1x1x8x128xf32>
    %5 = vector.shape_cast %4 : vector<1x1x1x8x128xf32> to vector<8x128xf32>
    %6 = arith.mulf %5, %3 : vector<8x128xf32>
    %7 = arith.addf %6, %1 : vector<8x128xf32>
    %c0_11 = arith.constant 0 : index
    %c1_12 = arith.constant 1 : index
    %c0_13 = arith.constant 0 : index
    %c0_14 = arith.constant 0 : index
    %c0_15 = arith.constant 0 : index
    %8 = vector.load %arg2[%c0_11, %c1_12, %c0_13, %c0_14, %c0_15] : memref<1x2x3x8x128xf32, #tpu.memory_space<vmem>>, vector<1x1x1x8x128xf32>
    %9 = vector.shape_cast %8 : vector<1x1x1x8x128xf32> to vector<8x128xf32>
    %10 = math.exp %9 : vector<8x128xf32>
    %11 = arith.mulf %10, %3 : vector<8x128xf32>
    %cst = arith.constant 5.000000e-01 : f32
    %12 = vector.broadcast %cst : f32 to vector<8x128xf32>
    %13 = arith.mulf %11, %12 : vector<8x128xf32>
    %14 = arith.subf %7, %13 : vector<8x128xf32>
    %cst_16 = arith.constant 0.000000e+00 : f32
    %cst_17 = arith.constant 1.600000e+01 : f32
    %15 = vector.broadcast %cst_16 : f32 to vector<8x128xf32>
    %16 = arith.maximumf %15, %14 : vector<8x128xf32>
    %17 = vector.broadcast %cst_17 : f32 to vector<8x128xf32>
    %18 = arith.minimumf %17, %16 : vector<8x128xf32>
    %19 = arith.addf %7, %13 : vector<8x128xf32>
    %cst_18 = arith.constant 0.000000e+00 : f32
    %cst_19 = arith.constant 1.600000e+01 : f32
    %20 = vector.broadcast %cst_18 : f32 to vector<8x128xf32>
    %21 = arith.maximumf %20, %19 : vector<8x128xf32>
    %22 = vector.broadcast %cst_19 : f32 to vector<8x128xf32>
    %23 = arith.minimumf %22, %21 : vector<8x128xf32>
    %24 = arith.addf %18, %23 : vector<8x128xf32>
    %cst_20 = arith.constant 5.000000e-01 : f32
    %25 = vector.broadcast %cst_20 : f32 to vector<8x128xf32>
    %26 = arith.mulf %24, %25 : vector<8x128xf32>
    %27 = arith.subf %23, %18 : vector<8x128xf32>
    %c0_21 = arith.constant 0 : index
    %c0_22 = arith.constant 0 : index
    %c0_23 = arith.constant 0 : index
    %c0_24 = arith.constant 0 : index
    %c0_25 = arith.constant 0 : index
    %28 = vector.load %arg4[%c0_21, %c0_22, %c0_23, %c0_24, %c0_25] : memref<1x2x3x8x128xf32, #tpu.memory_space<vmem>>, vector<1x1x1x8x128xf32>
    %29 = vector.shape_cast %28 : vector<1x1x1x8x128xf32> to vector<8x128xf32>
    %30 = vector.shape_cast %26 : vector<8x128xf32> to vector<1x1x1x8x128xf32>
    tpu.vector_store %arg4[%c0_21, %c0_22, %c0_23, %c0_24, %c0_25], %30 {strides = array<i32>} : memref<1x2x3x8x128xf32, #tpu.memory_space<vmem>>, vector<1x1x1x8x128xf32>,
    %c0_26 = arith.constant 0 : index
    %c1_27 = arith.constant 1 : index
    %c0_28 = arith.constant 0 : index
    %c0_29 = arith.constant 0 : index
    %c0_30 = arith.constant 0 : index
    %31 = vector.load %arg4[%c0_26, %c1_27, %c0_28, %c0_29, %c0_30] : memref<1x2x3x8x128xf32, #tpu.memory_space<vmem>>, vector<1x1x1x8x128xf32>
    %32 = vector.shape_cast %31 : vector<1x1x1x8x128xf32> to vector<8x128xf32>
    %33 = vector.shape_cast %27 : vector<8x128xf32> to vector<1x1x1x8x128xf32>
    tpu.vector_store %arg4[%c0_26, %c1_27, %c0_28, %c0_29, %c0_30], %33 {strides = array<i32>} : memref<1x2x3x8x128xf32, #tpu.memory_space<vmem>>, vector<1x1x1x8x128xf32>,
    %c0_31 = arith.constant 0 : index
    %c1_32 = arith.constant 1 : index
    %c0_33 = arith.constant 0 : index
    %c0_34 = arith.constant 0 : index
    %34 = vector.load %arg3[%c0_31, %c1_32, %c0_33, %c0_34] : memref<2x3x8x128xf32, #tpu.memory_space<vmem>>, vector<1x1x8x128xf32>
    %35 = vector.shape_cast %34 : vector<1x1x8x128xf32> to vector<8x128xf32>
    %c1_35 = arith.constant 1 : index
    %c1_36 = arith.constant 1 : index
    %c0_37 = arith.constant 0 : index
    %c0_38 = arith.constant 0 : index
    %36 = vector.load %arg3[%c1_35, %c1_36, %c0_37, %c0_38] : memref<2x3x8x128xf32, #tpu.memory_space<vmem>>, vector<1x1x8x128xf32>
    %37 = vector.shape_cast %36 : vector<1x1x8x128xf32> to vector<8x128xf32>
    %c0_39 = arith.constant 0 : index
    %c0_40 = arith.constant 0 : index
    %c1_41 = arith.constant 1 : index
    %c0_42 = arith.constant 0 : index
    %c0_43 = arith.constant 0 : index
    %38 = vector.load %arg2[%c0_39, %c0_40, %c1_41, %c0_42, %c0_43] : memref<1x2x3x8x128xf32, #tpu.memory_space<vmem>>, vector<1x1x1x8x128xf32>
    %39 = vector.shape_cast %38 : vector<1x1x1x8x128xf32> to vector<8x128xf32>
    %40 = arith.mulf %39, %37 : vector<8x128xf32>
    %41 = arith.addf %40, %35 : vector<8x128xf32>
    %c0_44 = arith.constant 0 : index
    %c1_45 = arith.constant 1 : index
    %c1_46 = arith.constant 1 : index
    %c0_47 = arith.constant 0 : index
    %c0_48 = arith.constant 0 : index
    %42 = vector.load %arg2[%c0_44, %c1_45, %c1_46, %c0_47, %c0_48] : memref<1x2x3x8x128xf32, #tpu.memory_space<vmem>>, vector<1x1x1x8x128xf32>
    %43 = vector.shape_cast %42 : vector<1x1x1x8x128xf32> to vector<8x128xf32>
    %44 = math.exp %43 : vector<8x128xf32>
    %45 = arith.mulf %44, %37 : vector<8x128xf32>
    %cst_49 = arith.constant 5.000000e-01 : f32
    %46 = vector.broadcast %cst_49 : f32 to vector<8x128xf32>
    %47 = arith.mulf %45, %46 : vector<8x128xf32>
    %48 = arith.subf %41, %47 : vector<8x128xf32>
    %cst_50 = arith.constant 0.000000e+00 : f32
    %cst_51 = arith.constant 1.600000e+01 : f32
    %49 = vector.broadcast %cst_50 : f32 to vector<8x128xf32>
    %50 = arith.maximumf %49, %48 : vector<8x128xf32>
    %51 = vector.broadcast %cst_51 : f32 to vector<8x128xf32>
    %52 = arith.minimumf %51, %50 : vector<8x128xf32>
    %53 = arith.addf %41, %47 : vector<8x128xf32>
    %cst_52 = arith.constant 0.000000e+00 : f32
    %cst_53 = arith.constant 1.600000e+01 : f32
    %54 = vector.broadcast %cst_52 : f32 to vector<8x128xf32>
    %55 = arith.maximumf %54, %53 : vector<8x128xf32>
    %56 = vector.broadcast %cst_53 : f32 to vector<8x128xf32>
    %57 = arith.minimumf %56, %55 : vector<8x128xf32>
    %58 = arith.addf %52, %57 : vector<8x128xf32>
    %cst_54 = arith.constant 5.000000e-01 : f32
    %59 = vector.broadcast %cst_54 : f32 to vector<8x128xf32>
    %60 = arith.mulf %58, %59 : vector<8x128xf32>
    %61 = arith.subf %57, %52 : vector<8x128xf32>
    %c0_55 = arith.constant 0 : index
    %c0_56 = arith.constant 0 : index
    %c1_57 = arith.constant 1 : index
    %c0_58 = arith.constant 0 : index
    %c0_59 = arith.constant 0 : index
    %62 = vector.load %arg4[%c0_55, %c0_56, %c1_57, %c0_58, %c0_59] : memref<1x2x3x8x128xf32, #tpu.memory_space<vmem>>, vector<1x1x1x8x128xf32>
    %63 = vector.shape_cast %62 : vector<1x1x1x8x128xf32> to vector<8x128xf32>
    %64 = vector.shape_cast %60 : vector<8x128xf32> to vector<1x1x1x8x128xf32>
    tpu.vector_store %arg4[%c0_55, %c0_56, %c1_57, %c0_58, %c0_59], %64 {strides = array<i32>} : memref<1x2x3x8x128xf32, #tpu.memory_space<vmem>>, vector<1x1x1x8x128xf32>,
    %c0_60 = arith.constant 0 : index
    %c1_61 = arith.constant 1 : index
    %c1_62 = arith.constant 1 : index
    %c0_63 = arith.constant 0 : index
    %c0_64 = arith.constant 0 : index
    %65 = vector.load %arg4[%c0_60, %c1_61, %c1_62, %c0_63, %c0_64] : memref<1x2x3x8x128xf32, #tpu.memory_space<vmem>>, vector<1x1x1x8x128xf32>
    %66 = vector.shape_cast %65 : vector<1x1x1x8x128xf32> to vector<8x128xf32>
    %67 = vector.shape_cast %61 : vector<8x128xf32> to vector<1x1x1x8x128xf32>
    tpu.vector_store %arg4[%c0_60, %c1_61, %c1_62, %c0_63, %c0_64], %67 {strides = array<i32>} : memref<1x2x3x8x128xf32, #tpu.memory_space<vmem>>, vector<1x1x1x8x128xf32>,
    %c0_65 = arith.constant 0 : index
    %c2 = arith.constant 2 : index
    %c0_66 = arith.constant 0 : index
    %c0_67 = arith.constant 0 : index
    %68 = vector.load %arg3[%c0_65, %c2, %c0_66, %c0_67] : memref<2x3x8x128xf32, #tpu.memory_space<vmem>>, vector<1x1x8x128xf32>
    %69 = vector.shape_cast %68 : vector<1x1x8x128xf32> to vector<8x128xf32>
    %c1_68 = arith.constant 1 : index
    %c2_69 = arith.constant 2 : index
    %c0_70 = arith.constant 0 : index
    %c0_71 = arith.constant 0 : index
    %70 = vector.load %arg3[%c1_68, %c2_69, %c0_70, %c0_71] : memref<2x3x8x128xf32, #tpu.memory_space<vmem>>, vector<1x1x8x128xf32>
    %71 = vector.shape_cast %70 : vector<1x1x8x128xf32> to vector<8x128xf32>
    %c0_72 = arith.constant 0 : index
    %c0_73 = arith.constant 0 : index
    %c2_74 = arith.constant 2 : index
    %c0_75 = arith.constant 0 : index
    %c0_76 = arith.constant 0 : index
    %72 = vector.load %arg2[%c0_72, %c0_73, %c2_74, %c0_75, %c0_76] : memref<1x2x3x8x128xf32, #tpu.memory_space<vmem>>, vector<1x1x1x8x128xf32>
    %73 = vector.shape_cast %72 : vector<1x1x1x8x128xf32> to vector<8x128xf32>
    %74 = arith.mulf %73, %71 : vector<8x128xf32>
    %75 = arith.addf %74, %69 : vector<8x128xf32>
    %c0_77 = arith.constant 0 : index
    %c1_78 = arith.constant 1 : index
    %c2_79 = arith.constant 2 : index
    %c0_80 = arith.constant 0 : index
    %c0_81 = arith.constant 0 : index
    %76 = vector.load %arg2[%c0_77, %c1_78, %c2_79, %c0_80, %c0_81] : memref<1x2x3x8x128xf32, #tpu.memory_space<vmem>>, vector<1x1x1x8x128xf32>
    %77 = vector.shape_cast %76 : vector<1x1x1x8x128xf32> to vector<8x128xf32>
    %78 = math.exp %77 : vector<8x128xf32>
    %79 = arith.mulf %78, %71 : vector<8x128xf32>
    %cst_82 = arith.constant 5.000000e-01 : f32
    %80 = vector.broadcast %cst_82 : f32 to vector<8x128xf32>
    %81 = arith.mulf %79, %80 : vector<8x128xf32>
    %82 = arith.subf %75, %81 : vector<8x128xf32>
    %cst_83 = arith.constant 0.000000e+00 : f32
    %cst_84 = arith.constant 1.600000e+01 : f32
    %83 = vector.broadcast %cst_83 : f32 to vector<8x128xf32>
    %84 = arith.maximumf %83, %82 : vector<8x128xf32>
    %85 = vector.broadcast %cst_84 : f32 to vector<8x128xf32>
    %86 = arith.minimumf %85, %84 : vector<8x128xf32>
    %87 = arith.addf %75, %81 : vector<8x128xf32>
    %cst_85 = arith.constant 0.000000e+00 : f32
    %cst_86 = arith.constant 1.600000e+01 : f32
    %88 = vector.broadcast %cst_85 : f32 to vector<8x128xf32>
    %89 = arith.maximumf %88, %87 : vector<8x128xf32>
    %90 = vector.broadcast %cst_86 : f32 to vector<8x128xf32>
    %91 = arith.minimumf %90, %89 : vector<8x128xf32>
    %92 = arith.addf %86, %91 : vector<8x128xf32>
    %cst_87 = arith.constant 5.000000e-01 : f32
    %93 = vector.broadcast %cst_87 : f32 to vector<8x128xf32>
    %94 = arith.mulf %92, %93 : vector<8x128xf32>
    %95 = arith.subf %91, %86 : vector<8x128xf32>
    %c0_88 = arith.constant 0 : index
    %c0_89 = arith.constant 0 : index
    %c2_90 = arith.constant 2 : index
    %c0_91 = arith.constant 0 : index
    %c0_92 = arith.constant 0 : index
    %96 = vector.load %arg4[%c0_88, %c0_89, %c2_90, %c0_91, %c0_92] : memref<1x2x3x8x128xf32, #tpu.memory_space<vmem>>, vector<1x1x1x8x128xf32>
    %97 = vector.shape_cast %96 : vector<1x1x1x8x128xf32> to vector<8x128xf32>
    %98 = vector.shape_cast %94 : vector<8x128xf32> to vector<1x1x1x8x128xf32>
    tpu.vector_store %arg4[%c0_88, %c0_89, %c2_90, %c0_91, %c0_92], %98 {strides = array<i32>} : memref<1x2x3x8x128xf32, #tpu.memory_space<vmem>>, vector<1x1x1x8x128xf32>,
    %c0_93 = arith.constant 0 : index
    %c1_94 = arith.constant 1 : index
    %c2_95 = arith.constant 2 : index
    %c0_96 = arith.constant 0 : index
    %c0_97 = arith.constant 0 : index
    %99 = vector.load %arg4[%c0_93, %c1_94, %c2_95, %c0_96, %c0_97] : memref<1x2x3x8x128xf32, #tpu.memory_space<vmem>>, vector<1x1x1x8x128xf32>
    %100 = vector.shape_cast %99 : vector<1x1x1x8x128xf32> to vector<8x128xf32>
    %101 = vector.shape_cast %95 : vector<8x128xf32> to vector<1x1x1x8x128xf32>
    tpu.vector_store %arg4[%c0_93, %c1_94, %c2_95, %c0_96, %c0_97], %101 {strides = array<i32>} : memref<1x2x3x8x128xf32, #tpu.memory_space<vmem>>, vector<1x1x1x8x128xf32>,
    return
  }
  func.func @transform_0(%arg0: i32, %arg1: i32) -> (i32, i32, i32, i32, i32) {
    %c0_i32 = arith.constant 0 : i32
    %c0_i32_0 = arith.constant 0 : i32
    %c0_i32_1 = arith.constant 0 : i32
    %c0_i32_2 = arith.constant 0 : i32
    return %arg1, %c0_i32, %c0_i32_0, %arg0, %c0_i32_1 : i32, i32, i32, i32, i32
  }
  func.func @transform_1(%arg0: i32, %arg1: i32) -> (i32, i32, i32, i32) {
    %c0_i32 = arith.constant 0 : i32
    %c0_i32_0 = arith.constant 0 : i32
    %c0_i32_1 = arith.constant 0 : i32
    %c0_i32_2 = arith.constant 0 : i32
    return %c0_i32, %c0_i32_0, %arg0, %c0_i32_1 : i32, i32, i32, i32
  }
  func.func @transform_2(%arg0: i32, %arg1: i32) -> (i32, i32, i32, i32, i32) {
    %c0_i32 = arith.constant 0 : i32
    %c0_i32_0 = arith.constant 0 : i32
    %c0_i32_1 = arith.constant 0 : i32
    %c0_i32_2 = arith.constant 0 : i32
    return %arg1, %c0_i32, %c0_i32_0, %arg0, %c0_i32_1 : i32, i32, i32, i32, i32
  }
}

</mosaic_0001>

<llo_original>
// kernel: _forward_impl.1
$region0: #{_forward_impl.1}
  #allocation0 [shape = 'u32[]', space=smem, size = 0x4, offset = 0x4, fixed_abs, tag = 'smem constant byte address 0x4 - core index']
  #allocation1 [shape = 'u32[144,128]{1,0:T(1,128)}', space=vmem, size = 0x12000, scoped, tag = 'internal scratch']
  %s0 = inlined_call_operand.vmem [shape: f32[2,2,3,8,128], index: 0, kind: input, shape index: {}]
  %s1 = inlined_call_operand.vmem [shape: f32[2,3,8,128], index: 1, kind: input, shape index: {}]
  %s2 = inlined_call_operand.vmem [shape: f32[2,2,3,8,128], index: 2, kind: output, shape index: {}]
  %s3 = sld [smem:[#allocation0]]
  $region41: #{_forward_impl.1} parent=0
    _
  %s5 = ssub.s32 1, %s3
  %s6 = scalar_select 0, %s5, %s3
  loop: start=0, step=1, limit=4
  $region2: #{_forward_impl.1} parent=0 // loop_pre_header
    _
  $region3: #{_forward_impl.1} parent=0 // loop_header
    %s8 = sphi 0, %s12
    %p9 = scmp.ge.s32.totalorder %s8, 4
    %s15 = sphi 0, %s27
    %s16 = sphi 0, %s23
    %s17 = sphi 0, %s15
    %s18 = sphi 0, %s16
    %s19 = sphi 0, %s17
    %s20 = sphi 0, %s18
    %s32 = sphi 0, %s34
    %s35 = sphi 0, %s32
    %s36 = sphi 0, %s35
    %s52 = sphi 0, %s36
    %s58 = sphi 0, %s60
    %s61 = sphi 0, %s58
    %s62 = sphi 0, %s61
    %s78 = sphi 0, %s62
    %s86 = sphi 0, %s88
    %s89 = sphi 0, %s86
    %s90 = sphi 0, %s89
    %s106 = sphi 0, %s90
  $region4: #{_forward_impl.1} parent=0 // loop_header_branch
    %11 = sbr.rel (%p9) target = $region8
  $region5: #{_forward_impl.1} parent=0 // loop_body
    %s13 = ssub.s32 %s8, 1
    %s14 = ssub.s32 %s8, 2
    %s21 = sadd.s32 1, %s16
    %p22 = scmp.ge.s32.totalorder %s21, 2
    %s23 = scalar_select %p22, 0, %s21
    %s24 = sadd.s32 1, %s15
    %s25 = scalar_select %p22, %s24, %s15
    %p26 = scmp.ge.s32.totalorder %s25, 1
    %s27 = scalar_select %p26, 0, %s25
    %s28 = ssub.s32 %s16, %s23
    %s29 = ssub.s32 %s15, %s27
    %s30 = sor.u32 %s28, %s29
    %p31 = scmp.eq.s32.totalorder %s30, 0
    %s33 = sadd.s32 %s32, 1
    %s34 = scalar_select %p31, %s32, %s33
    %p37 = pneg %p31
    %p38 = scmp.eq.s32.totalorder %s8, 1
    %p39 = por %p37, %p38
    %p40 = scmp.ne.s32.totalorder %s32, %s35
    %p41 = scmp.eq.s32.totalorder %s8, 0
    %p42 = por %p40, %p41
    %p43 = scmp.ne.s32.totalorder %s32, %s35
    %p44 = scmp.eq.s32.totalorder %s13, 1
    %p45 = por %p43, %p44
    %p46 = scmp.ne.s32.totalorder %s35, %s36
    %p47 = scmp.eq.s32.totalorder %s13, 0
    %p48 = por %p46, %p47
    %p49 = scmp.ne.s32.totalorder %s35, %s36
    %p50 = scmp.eq.s32.totalorder %s14, 1
    %p51 = por %p49, %p50
    %p53 = scmp.ne.s32.totalorder %s36, %s52
    %p54 = scmp.eq.s32.totalorder %s14, 0
    %p55 = por %p53, %p54
    %s56 = ssub.s32 %s15, %s27
    %p57 = scmp.eq.s32.totalorder %s56, 0
    %s59 = sadd.s32 %s58, 1
    %s60 = scalar_select %p57, %s58, %s59
    %p63 = pneg %p57
    %p64 = scmp.eq.s32.totalorder %s8, 1
    %p65 = por %p63, %p64
    %p66 = scmp.ne.s32.totalorder %s58, %s61
    %p67 = scmp.eq.s32.totalorder %s8, 0
    %p68 = por %p66, %p67
    %p69 = scmp.ne.s32.totalorder %s58, %s61
    %p70 = scmp.eq.s32.totalorder %s13, 1
    %p71 = por %p69, %p70
    %p72 = scmp.ne.s32.totalorder %s61, %s62
    %p73 = scmp.eq.s32.totalorder %s13, 0
    %p74 = por %p72, %p73
    %p75 = scmp.ne.s32.totalorder %s61, %s62
    %p76 = scmp.eq.s32.totalorder %s14, 1
    %p77 = por %p75, %p76
    %p79 = scmp.ne.s32.totalorder %s62, %s78
    %p80 = scmp.eq.s32.totalorder %s14, 0
    %p81 = por %p79, %p80
    %s82 = ssub.s32 %s16, %s23
    %s83 = ssub.s32 %s15, %s27
    %s84 = sor.u32 %s82, %s83
    %p85 = scmp.eq.s32.totalorder %s84, 0
    %s87 = sadd.s32 %s86, 1
    %s88 = scalar_select %p85, %s86, %s87
    %p91 = pneg %p85
    %p92 = scmp.eq.s32.totalorder %s8, 1
    %p93 = por %p91, %p92
    %p94 = scmp.ne.s32.totalorder %s86, %s89
    %p95 = scmp.eq.s32.totalorder %s8, 0
    %p96 = por %p94, %p95
    %p97 = scmp.ne.s32.totalorder %s86, %s89
    %p98 = scmp.eq.s32.totalorder %s13, 1
    %p99 = por %p97, %p98
    %p100 = scmp.ne.s32.totalorder %s89, %s90
    %p101 = scmp.eq.s32.totalorder %s13, 0
    %p102 = por %p100, %p101
    %p103 = scmp.ne.s32.totalorder %s89, %s90
    %p104 = scmp.eq.s32.totalorder %s14, 1
    %p105 = por %p103, %p104
    %p107 = scmp.ne.s32.totalorder %s90, %s106
    %p108 = scmp.eq.s32.totalorder %s14, 0
    %p109 = por %p107, %p108
    %p110 = scmp.le.s32.totalorder 1, %s8
    %p111 = scmp.lt.s32.totalorder %s8, 3
    %p112 = pnand %p110, %p111
    %p113 = pneg %p112
    // Predicated region
    $region9: #{_forward_impl.1} parent=5 // pred_check
      _
    $region10: #{_forward_impl.1} parent=5 // pred_check_branch
      %115 = sbr.rel (%p112) target = $region12
    $region11: #{_forward_impl.1} parent=5 // pred_region
      %s116 = ssub.s32 %s8, 1
      // Predicated region
      $region13: #{_forward_impl.1} parent=11 // pred_check
        %p117 = pneg %p74
      $region14: #{_forward_impl.1} parent=11 // pred_check_branch
        %119 = sbr.rel (%p117) target = $region16
      $region15: #{_forward_impl.1} parent=11 // pred_region
        %p120 = scmp.lt.s32.totalorder %s17, 0
        %s121 = scalar_select %p120, %s17, 0
        %s122 = smul.addr %s121, 8
        %s123 = scalar_lea.vmem %s1, %s122
      $region16: #{_forward_impl.1} parent=11 // pred_fallthru
        _
    $region12: #{_forward_impl.1} parent=5 // pred_fallthru
      _
    %p124 = scmp.lt.s32.totalorder %s8, 2
    // Predicated region
    $region17: #{_forward_impl.1} parent=5 // pred_check
      %p125 = pneg %p124
    $region18: #{_forward_impl.1} parent=5 // pred_check_branch
      %127 = sbr.rel (%p125) target = $region20
    $region19: #{_forward_impl.1} parent=5 // pred_region
      // Predicated region
      $region21: #{_forward_impl.1} parent=19 // pred_check
        %p128 = pneg %p42
      $region22: #{_forward_impl.1} parent=19 // pred_check_branch
        %130 = sbr.rel (%p128) target = $region24
      $region23: #{_forward_impl.1} parent=19 // pred_region
        %p131 = scmp.lt.s32.totalorder %s16, 1
        %s132 = scalar_select %p131, %s16, 1
        %p133 = scmp.lt.s32.totalorder %s15, 0
        %s134 = scalar_select %p133, %s15, 0
        %s135 = smul.addr %s132, 6
        %s136 = sadd.s32 %s134, %s135
        %s137 = smul.addr %s136, 8
        %s138 = scalar_lea.vmem %s0, %s137
      $region24: #{_forward_impl.1} parent=19 // pred_fallthru
        _
    $region20: #{_forward_impl.1} parent=5 // pred_fallthru
      _
    %p139 = scmp.le.s32.totalorder 1, %s8
    %p140 = scmp.lt.s32.totalorder %s8, 3
    %p141 = pnand %p139, %p140
    %p142 = pneg %p141
    // Predicated region
    $region25: #{_forward_impl.1} parent=5 // pred_check
      _
    $region26: #{_forward_impl.1} parent=5 // pred_check_branch
      %144 = sbr.rel (%p141) target = $region28
    $region27: #{_forward_impl.1} parent=5 // pred_region
      %s145 = ssub.s32 %s8, 1
      %p146 = scmp.lt.s32.totalorder %s18, 1
      %s147 = scalar_select %p146, %s18, 1
      %p148 = scmp.lt.s32.totalorder %s17, 0
      %s149 = scalar_select %p148, %s17, 0
      %s150 = smul.addr %s147, 6
      %s151 = sadd.s32 %s149, %s150
      %s152 = smul.addr %s151, 8
      %s153 = scalar_lea.vmem %s0, %s152
      %p154 = pneg %p48
      %p155 = pneg %p45
      %p156 = scmp.lt.s32.totalorder %s17, 0
      %s157 = scalar_select %p156, %s17, 0
      %s158 = smul.addr %s157, 8
      %s159 = scalar_lea.vmem %s1, %s158
      %p160 = pneg %p74
      %p161 = pneg %p71
      %p162 = pneg %p102
      %p163 = pneg %p99
      %p164 = scmp.lt.s32.totalorder %s18, 1
      %s165 = scalar_select %p164, %s18, 1
      %p166 = scmp.lt.s32.totalorder %s17, 0
      %s167 = scalar_select %p166, %s17, 0
      %s168 = smul.addr %s165, 6
      %s169 = sadd.s32 %s167, %s168
      %s170 = smul.addr %s169, 8
      %s171 = scalar_lea.vmem %s2, %s170
      %p172 = scmp.lt.s32.totalorder %s18, 1
      %s173 = scalar_select %p172, %s18, 1
      %p174 = scmp.lt.s32.totalorder %s17, 0
      %s175 = scalar_select %p174, %s17, 0
      %s176 = smul.addr %s173, 6
      %s177 = sadd.s32 %s175, %s176
      %s178 = smul.addr %s177, 8
      %s179 = scalar_lea.vmem %s0, %s178
      %p180 = scmp.lt.s32.totalorder %s17, 0
      %s181 = scalar_select %p180, %s17, 0
      %s182 = smul.addr %s181, 8
      %s183 = scalar_lea.vmem %s1, %s182
      %p184 = scmp.lt.s32.totalorder %s18, 1
      %s185 = scalar_select %p184, %s18, 1
      %p186 = scmp.lt.s32.totalorder %s17, 0
      %s187 = scalar_select %p186, %s17, 0
      %s188 = smul.addr %s185, 6
      %s189 = sadd.s32 %s187, %s188
      %s190 = smul.addr %s189, 8
      %s191 = scalar_lea.vmem %s2, %s190
      %v192 = vld [vmem:[%s183] sm:$0xff]
      %s193 = scalar_lea.vmem %s183, 24
      %v194 = vld [vmem:[%s193] sm:$0xff]
      %v195 = vld [vmem:[%s179] sm:$0xff]
      %v196 = vmul.f32 %v195, %v194
      %v197 = vadd.f32 %v196, %v192
      %s198 = scalar_lea.vmem %s179, 24
      %v199 = vld [vmem:[%s198] sm:$0xff]
      %v200 = vmul.f32 %v199, 1.442695
      %v201 = vpow.pop %v200
      %v202 = vmul.f32 %v201, %v194
      %v203 = vmul.f32 %v202, 0.5
      %v204 = vsub.f32 %v197, %v203
      %v205 = vmax.f32 %v204, 0.0
      %v206 = vmin.f32 %v205, 16.0
      %v207 = vadd.f32 %v197, %v203
      %v208 = vmax.f32 %v207, 0.0
      %v209 = vmin.f32 %v208, 16.0
      %v210 = vadd.f32 %v206, %v209
      %v211 = vmul.f32 %v210, 0.5
      %v212 = vsub.f32 %v209, %v206
      %213 = vst [vmem:[%s191] sm:$0xff] %v211
      %s214 = scalar_lea.vmem %s191, 24
      %215 = vst [vmem:[%s214] sm:$0xff] %v212
      %s216 = scalar_lea.vmem %s183, 8
      %v217 = vld [vmem:[%s216] sm:$0xff]
      %s218 = scalar_lea.vmem %s183, 32
      %v219 = vld [vmem:[%s218] sm:$0xff]
      %s220 = scalar_lea.vmem %s179, 8
      %v221 = vld [vmem:[%s220] sm:$0xff]
      %v222 = vmul.f32 %v221, %v219
      %v223 = vadd.f32 %v222, %v217
      %s224 = scalar_lea.vmem %s179, 32
      %v225 = vld [vmem:[%s224] sm:$0xff]
      %v226 = vmul.f32 %v225, 1.442695
      %v227 = vpow.pop %v226
      %v228 = vmul.f32 %v227, %v219
      %v229 = vmul.f32 %v228, 0.5
      %v230 = vsub.f32 %v223, %v229
      %v231 = vmax.f32 %v230, 0.0
      %v232 = vmin.f32 %v231, 16.0
      %v233 = vadd.f32 %v223, %v229
      %v234 = vmax.f32 %v233, 0.0
      %v235 = vmin.f32 %v234, 16.0
      %v236 = vadd.f32 %v232, %v235
      %v237 = vmul.f32 %v236, 0.5
      %v238 = vsub.f32 %v235, %v232
      %s239 = scalar_lea.vmem %s191, 8
      %240 = vst [vmem:[%s239] sm:$0xff] %v237
      %s241 = scalar_lea.vmem %s191, 32
      %242 = vst [vmem:[%s241] sm:$0xff] %v238
      %s243 = scalar_lea.vmem %s183, 16
      %v244 = vld [vmem:[%s243] sm:$0xff]
      %s245 = scalar_lea.vmem %s183, 40
      %v246 = vld [vmem:[%s245] sm:$0xff]
      %s247 = scalar_lea.vmem %s179, 16
      %v248 = vld [vmem:[%s247] sm:$0xff]
      %v249 = vmul.f32 %v248, %v246
      %v250 = vadd.f32 %v249, %v244
      %s251 = scalar_lea.vmem %s179, 40
      %v252 = vld [vmem:[%s251] sm:$0xff]
      %v253 = vmul.f32 %v252, 1.442695
      %v254 = vpow.pop %v253
      %v255 = vmul.f32 %v254, %v246
      %v256 = vmul.f32 %v255, 0.5
      %v257 = vsub.f32 %v250, %v256
      %v258 = vmax.f32 %v257, 0.0
      %v259 = vmin.f32 %v258, 16.0
      %v260 = vadd.f32 %v250, %v256
      %v261 = vmax.f32 %v260, 0.0
      %v262 = vmin.f32 %v261, 16.0
      %v263 = vadd.f32 %v259, %v262
      %v264 = vmul.f32 %v263, 0.5
      %v265 = vsub.f32 %v262, %v259
      %s266 = scalar_lea.vmem %s191, 16
      %267 = vst [vmem:[%s266] sm:$0xff] %v264
      %s268 = scalar_lea.vmem %s191, 40
      %269 = vst [vmem:[%s268] sm:$0xff] %v265
      %p270 = scmp.lt.s32.totalorder %s18, 1
      %s271 = scalar_select %p270, %s18, 1
      %p272 = scmp.lt.s32.totalorder %s17, 0
      %s273 = scalar_select %p272, %s17, 0
      %s274 = smul.addr %s271, 6
      %s275 = sadd.s32 %s273, %s274
      %s276 = smul.addr %s275, 8
      %s277 = scalar_lea.vmem %s2, %s276
      // Predicated region
      $region29: #{_forward_impl.1} parent=27 // pred_check
        %p278 = pneg %p99
      $region30: #{_forward_impl.1} parent=27 // pred_check_branch
        %280 = sbr.rel (%p278) target = $region32
      $region31: #{_forward_impl.1} parent=27 // pred_region
        _
      $region32: #{_forward_impl.1} parent=27 // pred_fallthru
        _
    $region28: #{_forward_impl.1} parent=5 // pred_fallthru
      _
    %p281 = scmp.le.s32.totalorder 2, %s8
    // Predicated region
    $region33: #{_forward_impl.1} parent=5 // pred_check
      %p282 = pneg %p281
    $region34: #{_forward_impl.1} parent=5 // pred_check_branch
      %284 = sbr.rel (%p282) target = $region36
    $region35: #{_forward_impl.1} parent=5 // pred_region
      %s285 = ssub.s32 %s8, 2
      // Predicated region
      $region37: #{_forward_impl.1} parent=35 // pred_check
        %p286 = pneg %p105
      $region38: #{_forward_impl.1} parent=35 // pred_check_branch
        %288 = sbr.rel (%p286) target = $region40
      $region39: #{_forward_impl.1} parent=35 // pred_region
        %p289 = scmp.lt.s32.totalorder %s20, 1
        %s290 = scalar_select %p289, %s20, 1
        %p291 = scmp.lt.s32.totalorder %s19, 0
        %s292 = scalar_select %p291, %s19, 0
        %s293 = smul.addr %s290, 6
        %s294 = sadd.s32 %s292, %s293
        %s295 = smul.addr %s294, 8
        %s296 = scalar_lea.vmem %s2, %s295
      $region40: #{_forward_impl.1} parent=35 // pred_fallthru
        _
    $region36: #{_forward_impl.1} parent=5 // pred_fallthru
      _
  $region6: #{_forward_impl.1} parent=0 // loop_footer
    %s12 = sadd.s32 1, %s8
  $region7: #{_forward_impl.1} parent=0 // loop_footer_branch
    %7 = sbr.rel target = $region3
  $region8: #{_forward_impl.1} parent=0 // loop_exit
    _

</llo_original>
